<compile_context>
chip_gen: v6e
topology: v6e:2x2x1
jax: 0.10.0
libtpu: 0.0.40
codegen_flags: <defaults>
</compile_context>

<pallas_src>
import functools

import jax
import jax.numpy as jnp
from jax import lax
from jax.experimental import pallas as pl
from jax.experimental.pallas import tpu as pltpu


def _round_up(x, m):
    return ((x + m - 1) // m) * m


def _dot_loss_kernel(pred_ref, labels_ref, out_ref, acc_ref):
    """Grid = (B blocks, C blocks).  C axis is the (last, 'arbitrary') reduction."""
    k = pl.program_id(1)

    @pl.when(k == 0)
    def _init():
        acc_ref[...] = jnp.zeros_like(acc_ref)

    pred = pred_ref[...].astype(jnp.float32)        # (bB, bC) upcast in-kernel
    labels = labels_ref[...]                        # (bB, 1) int32
    bB, bC = pred.shape

    # Global column index of every lane in this C tile.
    col_ids = k * bC + lax.broadcasted_iota(jnp.int32, (bB, bC), 1)
    masked = jnp.where(col_ids == labels, pred, 0.0)  # (bB, bC), NaN-safe

    # Fold the bC lanes down to 128 with pure VPU adds (no XLU in steady state).
    folded = masked[:, 0:128]
    for j in range(1, bC // 128):
        folded = folded + masked[:, j * 128:(j + 1) * 128]
    acc_ref[...] += folded                            # (bB, 128)

    @pl.when(k == pl.num_programs(1) - 1)
    def _finalize():
        acc = acc_ref[...]                            # (bB, 128)
        # Fold sublane groups down to 8 rows (vreg-aligned slices, VPU adds).
        part = acc[0:8, :]
        for r in range(1, bB // 8):
            part = part + acc[r * 8:(r + 1) * 8, :]
        # Lane-dense, unmasked (1, 8, 128) store of this B-block's partials.
        out_ref[...] = part.reshape(1, 8, 128)


@functools.partial(jax.jit, static_argnames=("block_b", "block_c"))
def dot_loss(pred, labels, *, block_b=256, block_c=2048):
    """pred: (B, C) float (any dtype), labels: (B,) int -> scalar f32 mean loss."""
    B, C = pred.shape
    labels = labels.astype(jnp.int32)

    # Tile sizes: sublane-/lane-aligned, capped by the (padded) problem size.
    bB = min(_round_up(B, 8), _round_up(block_b, 8))
    bC = min(_round_up(C, 128), _round_up(block_c, 128))
    B_pad = _round_up(B, bB)
    C_pad = _round_up(C, bC)

    if (B_pad, C_pad) != (B, C):
        # Pad classes with zeros and padded rows with label -1 (never matches).
        pred = jnp.pad(pred, ((0, B_pad - B), (0, C_pad - C)))
        labels = jnp.pad(labels, (0, B_pad - B), constant_values=-1)
    labels_2d = labels.reshape(B_pad, 1)

    GB = B_pad // bB
    GC = C_pad // bC

    partials = pl.pallas_call(
        _dot_loss_kernel,
        out_shape=jax.ShapeDtypeStruct((GB, 8, 128), jnp.float32),
        grid_spec=pltpu.PrefetchScalarGridSpec(
            num_scalar_prefetch=0,
            grid=(GB, GC),
            in_specs=[
                pl.BlockSpec((bB, bC), lambda i, k: (i, k)),   # pred tile
                pl.BlockSpec((bB, 1), lambda i, k: (i, 0)),    # labels (resident per B block)
            ],
            out_specs=pl.BlockSpec((1, 8, 128), lambda i, k: (i, 0, 0)),
            scratch_shapes=[pltpu.VMEM((bB, 128), jnp.float32)],
        ),
        compiler_params=pltpu.CompilerParams(
            dimension_semantics=("parallel", "arbitrary"),
        ),
    )(pred, labels_2d)

    # loss_i = -pred[i, labels[i]]; mean over the TRUE batch size.
    return -jnp.sum(partials) / jnp.float32(B)


def _reference(pred, labels, num_classes):
    onehot = jax.nn.one_hot(labels, num_classes, dtype=jnp.float32)
    return jnp.mean(jnp.sum(-onehot * pred.astype(jnp.float32), axis=1))


if __name__ == "__main__":
    key = jax.random.PRNGKey(0)

    # Case 1: module's default toy shape (batch=8, num_classes=10).
    num_classes, batch = 10, 8
    kp, kl, key = jax.random.split(key, 3)
    pred = jax.random.normal(kp, (batch, num_classes), dtype=jnp.float32)
    labels = jax.random.randint(kl, (batch,), 0, num_classes, dtype=jnp.int32)

    loss = dot_loss(pred, labels)
    jax.block_until_ready(loss)
    loss_ref = _reference(pred, labels, num_classes)
    assert jnp.allclose(loss, loss_ref, atol=1e-5), (loss, loss_ref)

    # Case 2: exercise a multi-block grid (GB=2, GC=3) with padding + bf16 input.
    num_classes2, batch2 = 300, 16
    kp2, kl2, _ = jax.random.split(key, 3)
    pred2 = jax.random.normal(kp2, (batch2, num_classes2), dtype=jnp.bfloat16)
    labels2 = jax.random.randint(kl2, (batch2,), 0, num_classes2, dtype=jnp.int32)

    loss2 = dot_loss(pred2, labels2, block_b=8, block_c=128)
    jax.block_until_ready(loss2)
    loss2_ref = _reference(pred2, labels2, num_classes2)
    assert jnp.allclose(loss2, loss2_ref, atol=1e-2, rtol=1e-2), (loss2, loss2_ref)

    print("KERNEL_OK")
</pallas_src>

<mosaic_0001>
module attributes {stable_mosaic.version = 11 : i64} {
  func.func @_dot_loss_kernel(%arg0: i32, %arg1: i32, %arg2: memref<8x128xf32, #tpu.memory_space<vmem>>, %arg3: memref<8x1xi32, #tpu.memory_space<vmem>>, %arg4: memref<1x8x128xf32, #tpu.memory_space<vmem>>, %arg5: memref<8x128xf32, #tpu.memory_space<vmem>>) attributes {dimension_semantics = [#tpu.dimension_semantics<parallel>, #tpu.dimension_semantics<arbitrary>], iteration_bounds = array<i64: 1, 1>, scalar_prefetch = 0 : i64, scratch_operands = 1 : i64, tpu.core_type = #tpu.core_type<tc>, window_params = [{transform_indices = @transform_0, window_bounds = array<i64: 8, 128>}, {transform_indices = @transform_1, window_bounds = array<i64: 8, 1>}, {transform_indices = @transform_2, window_bounds = array<i64: 1, 8, 128>}]} {
    %c0_i32 = arith.constant 0 : i32
    %0 = arith.cmpi eq, %arg1, %c0_i32 : i32
    %1 = arith.extui %0 : i1 to i32
    %c0_i32_0 = arith.constant 0 : i32
    %2 = arith.cmpi ne, %1, %c0_i32_0 : i32
    scf.if %2 {
      %cst_10 = arith.constant 0.000000e+00 : f32
      %19 = vector.broadcast %cst_10 : f32 to vector<8x128xf32>
      %c0_11 = arith.constant 0 : index
      %c0_12 = arith.constant 0 : index
      %20 = vector.load %arg5[%c0_11, %c0_12] : memref<8x128xf32, #tpu.memory_space<vmem>>, vector<8x128xf32>
      tpu.vector_store %arg5[%c0_11, %c0_12], %19 {strides = array<i32>} : memref<8x128xf32, #tpu.memory_space<vmem>>, vector<8x128xf32>,
    } else {
    }
    %c0 = arith.constant 0 : index
    %c0_1 = arith.constant 0 : index
    %3 = vector.load %arg2[%c0, %c0_1] : memref<8x128xf32, #tpu.memory_space<vmem>>, vector<8x128xf32>
    %c0_2 = arith.constant 0 : index
    %c0_3 = arith.constant 0 : index
    %4 = vector.load %arg3[%c0_2, %c0_3] : memref<8x1xi32, #tpu.memory_space<vmem>>, vector<8x1xi32>
    %c128_i32 = arith.constant 128 : i32
    %5 = arith.muli %arg1, %c128_i32 : i32
    %6 = tpu.iota {dimensions = array<i32: 1>} : vector<8x128xi32>
    %7 = vector.broadcast %5 : i32 to vector<8x128xi32>
    %8 = arith.addi %7, %6 : vector<8x128xi32>
    %9 = vector.broadcast %4 : vector<8x1xi32> to vector<8x128xi32>
    %10 = arith.cmpi eq, %8, %9 : vector<8x128xi32>
    %cst = arith.constant 0.000000e+00 : f32
    %11 = vector.broadcast %cst : f32 to vector<8x128xf32>
    %12 = arith.select %10, %3, %11 : vector<8x128xi1>, vector<8x128xf32>
    %c0_4 = arith.constant 0 : index
    %c0_5 = arith.constant 0 : index
    %13 = vector.load %arg5[%c0_4, %c0_5] : memref<8x128xf32, #tpu.memory_space<vmem>>, vector<8x128xf32>
    %14 = arith.addf %13, %12 : vector<8x128xf32>
    %c0_6 = arith.constant 0 : index
    %c0_7 = arith.constant 0 : index
    %15 = vector.load %arg5[%c0_6, %c0_7] : memref<8x128xf32, #tpu.memory_space<vmem>>, vector<8x128xf32>
    tpu.vector_store %arg5[%c0_6, %c0_7], %14 {strides = array<i32>} : memref<8x128xf32, #tpu.memory_space<vmem>>, vector<8x128xf32>,
    %c0_i32_8 = arith.constant 0 : i32
    %16 = arith.cmpi eq, %arg1, %c0_i32_8 : i32
    %17 = arith.extui %16 : i1 to i32
    %c0_i32_9 = arith.constant 0 : i32
    %18 = arith.cmpi ne, %17, %c0_i32_9 : i32
    scf.if %18 {
      %c0_10 = arith.constant 0 : index
      %c0_11 = arith.constant 0 : index
      %19 = vector.load %arg5[%c0_10, %c0_11] : memref<8x128xf32, #tpu.memory_space<vmem>>, vector<8x128xf32>
      %20 = vector.shape_cast %19 : vector<8x128xf32> to vector<1x8x128xf32>
      %c0_12 = arith.constant 0 : index
      %c0_13 = arith.constant 0 : index
      %c0_14 = arith.constant 0 : index
      %21 = vector.load %arg4[%c0_12, %c0_13, %c0_14] : memref<1x8x128xf32, #tpu.memory_space<vmem>>, vector<1x8x128xf32>
      tpu.vector_store %arg4[%c0_12, %c0_13, %c0_14], %20 {strides = array<i32>} : memref<1x8x128xf32, #tpu.memory_space<vmem>>, vector<1x8x128xf32>,
    } else {
    }
    return
  }
  func.func @transform_0(%arg0: i32, %arg1: i32) -> (i32, i32) {
    %c0_i32 = arith.constant 0 : i32
    return %arg0, %arg1 : i32, i32
  }
  func.func @transform_1(%arg0: i32, %arg1: i32) -> (i32, i32) {
    %c0_i32 = arith.constant 0 : i32
    %c0_i32_0 = arith.constant 0 : i32
    return %arg0, %c0_i32 : i32, i32
  }
  func.func @transform_2(%arg0: i32, %arg1: i32) -> (i32, i32, i32) {
    %c0_i32 = arith.constant 0 : i32
    %c0_i32_0 = arith.constant 0 : i32
    %c0_i32_1 = arith.constant 0 : i32
    return %arg0, %c0_i32, %c0_i32_0 : i32, i32, i32
  }
}

</mosaic_0001>

<llo_original>
// kernel: dot_loss.1
$region0: #{dot_loss.1}
  #allocation0 [shape = 'u32[]', space=smem, size = 0x4, offset = 0x4, fixed_abs, tag = 'smem constant byte address 0x4 - core index']
  #allocation1 [shape = 'u32[144,128]{1,0:T(1,128)}', space=vmem, size = 0x12000, scoped, tag = 'internal scratch']
  #allocation2 [shape = 'f32[8,128]{1,0:T(8,128)}', space=vmem, size = 0x1000, scoped, tag = 'scratch operand']
  %s0 = inlined_call_operand.vmem [shape: f32[8,128], index: 0, kind: input, shape index: {}]
  %s1 = inlined_call_operand.vmem [shape: s32[8,1], index: 1, kind: input, shape index: {}]
  %s2 = inlined_call_operand.vmem [shape: f32[1,8,128], index: 2, kind: output, shape index: {}]
  %s3 = sld [smem:[#allocation0]]
  $region26: #{dot_loss.1} parent=0
    _
  %s5 = ssub.s32 1, %s3
  %s6 = scalar_select 0, %s5, %s3
  // Predicated region
  $region2: #{dot_loss.1} parent=0 // pred_check
    _
  $region3: #{dot_loss.1} parent=0 // pred_check_branch
    %8 = sbr.rel (0) target = $region5
  $region4: #{dot_loss.1} parent=0 // pred_region
    _
  $region5: #{dot_loss.1} parent=0 // pred_fallthru
    _
  // Predicated region
  $region6: #{dot_loss.1} parent=0 // pred_check
    _
  $region7: #{dot_loss.1} parent=0 // pred_check_branch
    %10 = sbr.rel (0) target = $region9
  $region8: #{dot_loss.1} parent=0 // pred_region
    _
  $region9: #{dot_loss.1} parent=0 // pred_fallthru
    _
  %p11 = scmp.eq.s32.totalorder 0, 0
  // Predicated region
  $region10: #{dot_loss.1} parent=0 // pred_check
    %p12 = pneg %p11
  $region11: #{dot_loss.1} parent=0 // pred_check_branch
    %14 = sbr.rel (%p12) target = $region13
  $region12: #{dot_loss.1} parent=0 // pred_region
    %15 = vst [vmem:[#allocation2] sm:$0xff] 0.0
  $region13: #{dot_loss.1} parent=0 // pred_fallthru
    _
  %v16 = vld [vmem:[%s0] sm:$0xff]
  %v17 = vld [vmem:[%s1] sm:$0xff]
  %s18 = smul.u32 0, 128
  %v19 = vlaneseq
  %v20 = vand.u32 %v19, 127
  %v21 = vstv %s18
  %v22 = vadd.s32 %v21, %v20
  %23 = vset.pattern.permute.xlu0 0
  %24 = vperm.xlu0 %23, %v17
  %v25 = vpop.permute.xlu0 %24
  %vm26 = vcmp.eq.s32.totalorder %v22, %v25
  %v27 = vsel %vm26, %v16, 0.0
  %v28 = vld [vmem:[#allocation2] sm:$0xff]
  %v29 = vadd.f32 %v28, %v27
  %30 = vst [vmem:[#allocation2] sm:$0xff] %v29
  // Predicated region
  $region14: #{dot_loss.1} parent=0 // pred_check
    %p31 = pneg %p11
  $region15: #{dot_loss.1} parent=0 // pred_check_branch
    %33 = sbr.rel (%p31) target = $region17
  $region16: #{dot_loss.1} parent=0 // pred_region
    %v34 = vld [vmem:[#allocation2] sm:$0xff]
    %35 = vst [vmem:[%s2] sm:$0xff] %v34
  $region17: #{dot_loss.1} parent=0 // pred_fallthru
    _
  // Predicated region
  $region18: #{dot_loss.1} parent=0 // pred_check
    _
  $region19: #{dot_loss.1} parent=0 // pred_check_branch
    %37 = sbr.rel (0) target = $region21
  $region20: #{dot_loss.1} parent=0 // pred_region
    _
  $region21: #{dot_loss.1} parent=0 // pred_fallthru
    _
  // Predicated region
  $region22: #{dot_loss.1} parent=0 // pred_check
    _
  $region23: #{dot_loss.1} parent=0 // pred_check_branch
    %39 = sbr.rel (0) target = $region25
  $region24: #{dot_loss.1} parent=0 // pred_region
    _
  $region25: #{dot_loss.1} parent=0 // pred_fallthru
    _

</llo_original>
